<compile_context>
chip_gen: v7x
topology: tpu7x:2x2x1
jax: 0.10.0
libtpu: 0.0.40
codegen_flags: <defaults>
</compile_context>

<pallas_src>
import jax
import jax.numpy as jnp
from jax.experimental import pallas as pl
from jax.experimental.pallas import tpu as pltpu


def block_forward(x_nchw, w_oihw, bias, gamma, beta, *, stride=1, eps=1e-5,
                  matmul_dtype=jnp.float32):
    """Forward pass of `Block` (Conv2d -> BatchNorm2d(batch stats) -> ReLU)."""
    assert stride == 1  # TODO(synk): stride > 1 not implemented (module default is 1)
    N, C, H, W = x_nchw.shape
    OC, C_in, KH, KW = w_oihw.shape
    assert C_in == C
    OH = H - KH + 1
    OW = W - KW + 1
    NOH, LW = N * OH, OW * OC           # kernel-output layout: (N*OH, OW*OC)
    M = N * OH * OW                     # elements per channel for batch statistics
    f32 = jnp.float32

    # Conv bias cancels exactly against BatchNorm's batch-mean subtraction, so it is
    # intentionally not applied (forward output is identical).
    del bias

    # ---- activation: ONE transpose+reshape to (N*H, W*C); read once by the kernel ----
    x2 = jnp.transpose(x_nchw, (0, 2, 3, 1)).reshape(N * H, W * C).astype(matmul_dtype)

    # ---- fold conv weights into KH banded (W*C, OW*OC) matrices (tiny, weight-side) --
    # wband[kh][w*C + c, ow*OC + oc] = w[oc, c, kh, w - ow]  for 0 <= w - ow < KW
    w_t = jnp.transpose(w_oihw, (2, 3, 1, 0)).astype(f32)            # (KH, KW, C, OC)
    sel = (jnp.arange(W)[None, :, None] ==
           jnp.arange(OW)[None, None, :] + jnp.arange(KW)[:, None, None]).astype(f32)
    wband = jnp.einsum("kwo,hkcd->hwcod", sel, w_t).reshape(KH, W * C, LW)
    wband = wband.astype(matmul_dtype)

    # gamma/beta tiled across the OW lane groups (tiny (OC,)-sized parameter math).
    gb = jnp.stack([jnp.tile(gamma.astype(f32), OW), jnp.tile(beta.astype(f32), OW)])

    def kernel(x_ref, wband_ref, gb_ref, out_ref, y_ref):
        # ---- conv: KH banded matmuls per batch image, lane-dense (N*OH, OW*OC) ----
        for n in range(N):
            y_n = jnp.zeros((OH, LW), f32)
            for kh in range(KH):
                xs = x_ref[n * H + kh: n * H + kh + OH, :]           # (OH, W*C)
                y_n = y_n + jnp.dot(xs, wband_ref[kh],
                                    preferred_element_type=f32)
            y_ref[n * OH:(n + 1) * OH, :] = y_n                      # VMEM-resident
        y = y_ref[...]                                               # (NOH, LW) f32

        # ---- batch stats on the MXU ------------------------------------------------
        # fold[i, j] = 1 iff lanes i and j belong to the same output channel; a
        # (1, LW) @ fold matmul reduces the OW lane groups per channel AND
        # rebroadcasts the per-channel value back across all OW*OC lanes.
        li = jax.lax.broadcasted_iota(jnp.int32, (LW, LW), 0) % OC
        lj = jax.lax.broadcasted_iota(jnp.int32, (LW, LW), 1) % OC
        fold = (li == lj).astype(f32)                                # (LW, LW)
        ones = jnp.ones((1, NOH), f32)
        inv_m = 1.0 / float(M)

        mean = jnp.dot(jnp.dot(ones, y, preferred_element_type=f32), fold,
                       preferred_element_type=f32) * inv_m           # (1, LW)
        d = y - mean                                                 # two-pass variance
        var = jnp.dot(jnp.dot(ones, d * d, preferred_element_type=f32), fold,
                      preferred_element_type=f32) * inv_m            # (1, LW), biased

        # ---- fused BatchNorm (per-lane scale/shift) + ReLU -------------------------
        scale = gb_ref[0:1, :] * jax.lax.rsqrt(var + eps)
        shift = gb_ref[1:2, :] - mean * scale
        out_ref[...] = jnp.maximum(y * scale + shift, 0.0).astype(out_ref.dtype)

    out2 = pl.pallas_call(
        kernel,
        out_shape=jax.ShapeDtypeStruct((NOH, LW), f32),
        grid=(1,),
        in_specs=[
            pl.BlockSpec((N * H, W * C), lambda i: (0, 0)),
            pl.BlockSpec((KH, W * C, LW), lambda i: (0, 0, 0)),
            pl.BlockSpec((2, LW), lambda i: (0, 0)),
        ],
        out_specs=pl.BlockSpec((NOH, LW), lambda i: (0, 0)),
        scratch_shapes=[pltpu.VMEM((NOH, LW), jnp.float32)],
        compiler_params=pltpu.CompilerParams(
            dimension_semantics=("arbitrary",)),
        # TODO(synk): at larger shapes, add a leading "parallel" grid axis over
        # row-chunks with per-chunk partial stats (reduced in a tiny epilogue) so
        # v7x's second TensorCore gets work; budget tiles against its 64 MiB VMEM.
    )(x2, wband, gb)

    # TODO(synk): the final reshape/transpose could be dropped if the consumer
    # accepts NHWC; PyTorch semantics require NCHW.
    out = out2.reshape(N, OH, OW, OC)
    return jnp.transpose(out, (0, 3, 1, 2))
    # TODO(synk): BatchNorm running-stat (momentum) updates are a training side
    # effect with no forward-output dependency; not reproduced here.


def _reference(x_nchw, w_oihw, bias, gamma, beta, eps=1e-5):
    """Pure-JAX reference (same semantics) for a sanity check."""
    y = jax.lax.conv_general_dilated(
        x_nchw.astype(jnp.float32), w_oihw.astype(jnp.float32),
        window_strides=(1, 1), padding="VALID",
        dimension_numbers=("NCHW", "OIHW", "NCHW"))
    y = y + bias.reshape(1, -1, 1, 1)
    mean = jnp.mean(y, axis=(0, 2, 3), keepdims=True)
    var = jnp.mean((y - mean) ** 2, axis=(0, 2, 3), keepdims=True)
    y = (y - mean) * jax.lax.rsqrt(var + eps)
    y = y * gamma.reshape(1, -1, 1, 1) + beta.reshape(1, -1, 1, 1)
    return jnp.maximum(y, 0.0)


if __name__ == "__main__":
    # Small shapes consistent with the module: in_channel=4, out_channel=8, k=3, stride=1.
    N, Cin, H, W = 2, 4, 16, 16
    Cout, K = 8, 3

    key = jax.random.PRNGKey(0)
    kx, kw, kb, kg, kbeta = jax.random.split(key, 5)

    x = jax.random.normal(kx, (N, Cin, H, W), dtype=jnp.float32)
    w = jax.random.normal(kw, (Cout, Cin, K, K), dtype=jnp.float32) * 0.1
    b = jax.random.normal(kb, (Cout,), dtype=jnp.float32) * 0.1
    gamma = 1.0 + 0.1 * jax.random.normal(kg, (Cout,), dtype=jnp.float32)
    beta = 0.1 * jax.random.normal(kbeta, (Cout,), dtype=jnp.float32)

    out = jax.block_until_ready(jax.jit(block_forward)(x, w, b, gamma, beta))
    ref = jax.block_until_ready(_reference(x, w, b, gamma, beta))

    assert out.shape == (N, Cout, H - K + 1, W - K + 1), out.shape
    assert jnp.allclose(out, ref, rtol=2e-3, atol=2e-3), float(jnp.max(jnp.abs(out - ref)))

    print("KERNEL_OK")
</pallas_src>

<mosaic_0001>
module attributes {stable_mosaic.version = 11 : i64} {
  func.func @kernel(%arg0: i32, %arg1: memref<32x64xf32, #tpu.memory_space<vmem>>, %arg2: memref<3x64x112xf32, #tpu.memory_space<vmem>>, %arg3: memref<2x112xf32, #tpu.memory_space<vmem>>, %arg4: memref<28x112xf32, #tpu.memory_space<vmem>>, %arg5: memref<28x112xf32, #tpu.memory_space<vmem>>) attributes {dimension_semantics = [#tpu.dimension_semantics<arbitrary>], iteration_bounds = array<i64: 1>, scalar_prefetch = 0 : i64, scratch_operands = 1 : i64, tpu.core_type = #tpu.core_type<tc>, window_params = [{pipeline_mode = #tpu.pipeline_mode<synchronous>, transform_indices = @transform_0, window_bounds = array<i64: 32, 64>}, {pipeline_mode = #tpu.pipeline_mode<synchronous>, transform_indices = @transform_1, window_bounds = array<i64: 3, 64, 112>}, {pipeline_mode = #tpu.pipeline_mode<synchronous>, transform_indices = @transform_2, window_bounds = array<i64: 2, 112>}, {pipeline_mode = #tpu.pipeline_mode<synchronous>, transform_indices = @transform_3, window_bounds = array<i64: 28, 112>}]} {
    %cst = arith.constant 0.000000e+00 : f32
    %0 = vector.broadcast %cst : f32 to vector<14x112xf32>
    %c0 = arith.constant 0 : index
    %c0_0 = arith.constant 0 : index
    %1 = vector.load %arg1[%c0, %c0_0] : memref<32x64xf32, #tpu.memory_space<vmem>>, vector<14x64xf32>
    %c0_1 = arith.constant 0 : index
    %c0_2 = arith.constant 0 : index
    %c0_3 = arith.constant 0 : index
    %2 = vector.load %arg2[%c0_1, %c0_2, %c0_3] : memref<3x64x112xf32, #tpu.memory_space<vmem>>, vector<1x64x112xf32>
    %3 = vector.shape_cast %2 : vector<1x64x112xf32> to vector<64x112xf32>
    %cst_4 = arith.constant dense<0.000000e+00> : vector<14x112xf32>
    %4 = tpu.matmul %1, %3, %cst_4 {dimension_numbers = #tpu.dot_dimension_numbers<[1], [0], [0], [1], [0, 0, 1, 1], [], []>} : vector<14x64xf32>, vector<64x112xf32>, vector<14x112xf32> -> vector<14x112xf32>
    %5 = arith.addf %0, %4 : vector<14x112xf32>
    %c1 = arith.constant 1 : index
    %c0_5 = arith.constant 0 : index
    %6 = vector.load %arg1[%c1, %c0_5] : memref<32x64xf32, #tpu.memory_space<vmem>>, vector<14x64xf32>
    %c1_6 = arith.constant 1 : index
    %c0_7 = arith.constant 0 : index
    %c0_8 = arith.constant 0 : index
    %7 = vector.load %arg2[%c1_6, %c0_7, %c0_8] : memref<3x64x112xf32, #tpu.memory_space<vmem>>, vector<1x64x112xf32>
    %8 = vector.shape_cast %7 : vector<1x64x112xf32> to vector<64x112xf32>
    %cst_9 = arith.constant dense<0.000000e+00> : vector<14x112xf32>
    %9 = tpu.matmul %6, %8, %cst_9 {dimension_numbers = #tpu.dot_dimension_numbers<[1], [0], [0], [1], [0, 0, 1, 1], [], []>} : vector<14x64xf32>, vector<64x112xf32>, vector<14x112xf32> -> vector<14x112xf32>
    %10 = arith.addf %5, %9 : vector<14x112xf32>
    %c2 = arith.constant 2 : index
    %c0_10 = arith.constant 0 : index
    %11 = vector.load %arg1[%c2, %c0_10] : memref<32x64xf32, #tpu.memory_space<vmem>>, vector<14x64xf32>
    %c2_11 = arith.constant 2 : index
    %c0_12 = arith.constant 0 : index
    %c0_13 = arith.constant 0 : index
    %12 = vector.load %arg2[%c2_11, %c0_12, %c0_13] : memref<3x64x112xf32, #tpu.memory_space<vmem>>, vector<1x64x112xf32>
    %13 = vector.shape_cast %12 : vector<1x64x112xf32> to vector<64x112xf32>
    %cst_14 = arith.constant dense<0.000000e+00> : vector<14x112xf32>
    %14 = tpu.matmul %11, %13, %cst_14 {dimension_numbers = #tpu.dot_dimension_numbers<[1], [0], [0], [1], [0, 0, 1, 1], [], []>} : vector<14x64xf32>, vector<64x112xf32>, vector<14x112xf32> -> vector<14x112xf32>
    %15 = arith.addf %10, %14 : vector<14x112xf32>
    %c0_15 = arith.constant 0 : index
    %c0_16 = arith.constant 0 : index
    %16 = vector.load %arg5[%c0_15, %c0_16] : memref<28x112xf32, #tpu.memory_space<vmem>>, vector<14x112xf32>
    tpu.vector_store %arg5[%c0_15, %c0_16], %15 {strides = array<i32>} : memref<28x112xf32, #tpu.memory_space<vmem>>, vector<14x112xf32>,
    %cst_17 = arith.constant 0.000000e+00 : f32
    %17 = vector.broadcast %cst_17 : f32 to vector<14x112xf32>
    %c16 = arith.constant 16 : index
    %c0_18 = arith.constant 0 : index
    %18 = vector.load %arg1[%c16, %c0_18] : memref<32x64xf32, #tpu.memory_space<vmem>>, vector<14x64xf32>
    %c0_19 = arith.constant 0 : index
    %c0_20 = arith.constant 0 : index
    %c0_21 = arith.constant 0 : index
    %19 = vector.load %arg2[%c0_19, %c0_20, %c0_21] : memref<3x64x112xf32, #tpu.memory_space<vmem>>, vector<1x64x112xf32>
    %20 = vector.shape_cast %19 : vector<1x64x112xf32> to vector<64x112xf32>
    %cst_22 = arith.constant dense<0.000000e+00> : vector<14x112xf32>
    %21 = tpu.matmul %18, %20, %cst_22 {dimension_numbers = #tpu.dot_dimension_numbers<[1], [0], [0], [1], [0, 0, 1, 1], [], []>} : vector<14x64xf32>, vector<64x112xf32>, vector<14x112xf32> -> vector<14x112xf32>
    %22 = arith.addf %17, %21 : vector<14x112xf32>
    %c17 = arith.constant 17 : index
    %c0_23 = arith.constant 0 : index
    %23 = vector.load %arg1[%c17, %c0_23] : memref<32x64xf32, #tpu.memory_space<vmem>>, vector<14x64xf32>
    %c1_24 = arith.constant 1 : index
    %c0_25 = arith.constant 0 : index
    %c0_26 = arith.constant 0 : index
    %24 = vector.load %arg2[%c1_24, %c0_25, %c0_26] : memref<3x64x112xf32, #tpu.memory_space<vmem>>, vector<1x64x112xf32>
    %25 = vector.shape_cast %24 : vector<1x64x112xf32> to vector<64x112xf32>
    %cst_27 = arith.constant dense<0.000000e+00> : vector<14x112xf32>
    %26 = tpu.matmul %23, %25, %cst_27 {dimension_numbers = #tpu.dot_dimension_numbers<[1], [0], [0], [1], [0, 0, 1, 1], [], []>} : vector<14x64xf32>, vector<64x112xf32>, vector<14x112xf32> -> vector<14x112xf32>
    %27 = arith.addf %22, %26 : vector<14x112xf32>
    %c18 = arith.constant 18 : index
    %c0_28 = arith.constant 0 : index
    %28 = vector.load %arg1[%c18, %c0_28] : memref<32x64xf32, #tpu.memory_space<vmem>>, vector<14x64xf32>
    %c2_29 = arith.constant 2 : index
    %c0_30 = arith.constant 0 : index
    %c0_31 = arith.constant 0 : index
    %29 = vector.load %arg2[%c2_29, %c0_30, %c0_31] : memref<3x64x112xf32, #tpu.memory_space<vmem>>, vector<1x64x112xf32>
    %30 = vector.shape_cast %29 : vector<1x64x112xf32> to vector<64x112xf32>
    %cst_32 = arith.constant dense<0.000000e+00> : vector<14x112xf32>
    %31 = tpu.matmul %28, %30, %cst_32 {dimension_numbers = #tpu.dot_dimension_numbers<[1], [0], [0], [1], [0, 0, 1, 1], [], []>} : vector<14x64xf32>, vector<64x112xf32>, vector<14x112xf32> -> vector<14x112xf32>
    %32 = arith.addf %27, %31 : vector<14x112xf32>
    %c14 = arith.constant 14 : index
    %c0_33 = arith.constant 0 : index
    %33 = vector.load %arg5[%c14, %c0_33] : memref<28x112xf32, #tpu.memory_space<vmem>>, vector<14x112xf32>
    tpu.vector_store %arg5[%c14, %c0_33], %32 {strides = array<i32>} : memref<28x112xf32, #tpu.memory_space<vmem>>, vector<14x112xf32>,
    %c0_34 = arith.constant 0 : index
    %c0_35 = arith.constant 0 : index
    %34 = vector.load %arg5[%c0_34, %c0_35] : memref<28x112xf32, #tpu.memory_space<vmem>>, vector<28x112xf32>
    %35 = tpu.iota {dimensions = array<i32: 0>} : vector<112x112xi32>
    %c8_i32 = arith.constant 8 : i32
    %c0_i32 = arith.constant 0 : i32
    %36 = arith.cmpi eq, %c8_i32, %c0_i32 : i32
    %c1_i32 = arith.constant 1 : i32
    %37 = arith.select %36, %c1_i32, %c8_i32 : i32
    %38 = vector.broadcast %37 : i32 to vector<112x112xi32>
    %39 = arith.remsi %35, %38 : vector<112x112xi32>
    %c0_i32_36 = arith.constant 0 : i32
    %40 = vector.broadcast %c0_i32_36 : i32 to vector<112x112xi32>
    %41 = arith.cmpi ne, %39, %40 : vector<112x112xi32>
    %c0_i32_37 = arith.constant 0 : i32
    %42 = vector.broadcast %c0_i32_37 : i32 to vector<112x112xi32>
    %43 = arith.cmpi slt, %39, %42 : vector<112x112xi32>
    %c0_i32_38 = arith.constant 0 : i32
    %44 = arith.cmpi slt, %37, %c0_i32_38 : i32
    %45 = vector.broadcast %44 : i1 to vector<112x112xi1>
    %46 = vector.broadcast %45 : vector<112x112xi1> to vector<112x112xi1>
    %47 = arith.xori %43, %46 : vector<112x112xi1>
    %48 = arith.andi %47, %41 : vector<112x112xi1>
    %49 = vector.broadcast %37 : i32 to vector<112x112xi32>
    %50 = arith.addi %39, %49 : vector<112x112xi32>
    %51 = arith.select %48, %50, %39 : vector<112x112xi1>, vector<112x112xi32>
    %52 = tpu.iota {dimensions = array<i32: 1>} : vector<112x112xi32>
    %c8_i32_39 = arith.constant 8 : i32
    %c0_i32_40 = arith.constant 0 : i32
    %53 = arith.cmpi eq, %c8_i32_39, %c0_i32_40 : i32
    %c1_i32_41 = arith.constant 1 : i32
    %54 = arith.select %53, %c1_i32_41, %c8_i32_39 : i32
    %55 = vector.broadcast %54 : i32 to vector<112x112xi32>
    %56 = arith.remsi %52, %55 : vector<112x112xi32>
    %c0_i32_42 = arith.constant 0 : i32
    %57 = vector.broadcast %c0_i32_42 : i32 to vector<112x112xi32>
    %58 = arith.cmpi ne, %56, %57 : vector<112x112xi32>
    %c0_i32_43 = arith.constant 0 : i32
    %59 = vector.broadcast %c0_i32_43 : i32 to vector<112x112xi32>
    %60 = arith.cmpi slt, %56, %59 : vector<112x112xi32>
    %c0_i32_44 = arith.constant 0 : i32
    %61 = arith.cmpi slt, %54, %c0_i32_44 : i32
    %62 = vector.broadcast %61 : i1 to vector<112x112xi1>
    %63 = vector.broadcast %62 : vector<112x112xi1> to vector<112x112xi1>
    %64 = arith.xori %60, %63 : vector<112x112xi1>
    %65 = arith.andi %64, %58 : vector<112x112xi1>
    %66 = vector.broadcast %54 : i32 to vector<112x112xi32>
    %67 = arith.addi %56, %66 : vector<112x112xi32>
    %68 = arith.select %65, %67, %56 : vector<112x112xi1>, vector<112x112xi32>
    %69 = arith.cmpi eq, %51, %68 : vector<112x112xi32>
    %70 = arith.extui %69 : vector<112x112xi1> to vector<112x112xi32>
    %71 = arith.sitofp %70 : vector<112x112xi32> to vector<112x112xf32>
    %cst_45 = arith.constant 1.000000e+00 : f32
    %72 = vector.broadcast %cst_45 : f32 to vector<1x28xf32>
    %cst_46 = arith.constant dense<0.000000e+00> : vector<1x112xf32>
    %73 = tpu.matmul %72, %34, %cst_46 {dimension_numbers = #tpu.dot_dimension_numbers<[1], [0], [0], [1], [0, 0, 1, 1], [], []>} : vector<1x28xf32>, vector<28x112xf32>, vector<1x112xf32> -> vector<1x112xf32>
    %cst_47 = arith.constant dense<0.000000e+00> : vector<1x112xf32>
    %74 = tpu.matmul %73, %71, %cst_47 {dimension_numbers = #tpu.dot_dimension_numbers<[1], [0], [0], [1], [0, 0, 1, 1], [], []>} : vector<1x112xf32>, vector<112x112xf32>, vector<1x112xf32> -> vector<1x112xf32>
    %cst_48 = arith.constant 0.00255102036 : f32
    %75 = vector.broadcast %cst_48 : f32 to vector<1x112xf32>
    %76 = arith.mulf %74, %75 : vector<1x112xf32>
    %77 = vector.broadcast %76 : vector<1x112xf32> to vector<28x112xf32>
    %78 = arith.subf %34, %77 : vector<28x112xf32>
    %79 = arith.mulf %78, %78 : vector<28x112xf32>
    %cst_49 = arith.constant dense<0.000000e+00> : vector<1x112xf32>
    %80 = tpu.matmul %72, %79, %cst_49 {dimension_numbers = #tpu.dot_dimension_numbers<[1], [0], [0], [1], [0, 0, 1, 1], [], []>} : vector<1x28xf32>, vector<28x112xf32>, vector<1x112xf32> -> vector<1x112xf32>
    %cst_50 = arith.constant dense<0.000000e+00> : vector<1x112xf32>
    %81 = tpu.matmul %80, %71, %cst_50 {dimension_numbers = #tpu.dot_dimension_numbers<[1], [0], [0], [1], [0, 0, 1, 1], [], []>} : vector<1x112xf32>, vector<112x112xf32>, vector<1x112xf32> -> vector<1x112xf32>
    %cst_51 = arith.constant 0.00255102036 : f32
    %82 = vector.broadcast %cst_51 : f32 to vector<1x112xf32>
    %83 = arith.mulf %81, %82 : vector<1x112xf32>
    %c0_52 = arith.constant 0 : index
    %c0_53 = arith.constant 0 : index
    %84 = vector.load %arg3[%c0_52, %c0_53] : memref<2x112xf32, #tpu.memory_space<vmem>>, vector<1x112xf32>
    %cst_54 = arith.constant 9.99999974E-6 : f32
    %85 = vector.broadcast %cst_54 : f32 to vector<1x112xf32>
    %86 = arith.addf %83, %85 : vector<1x112xf32>
    %87 = math.rsqrt %86 : vector<1x112xf32>
    %88 = arith.mulf %84, %87 : vector<1x112xf32>
    %c1_55 = arith.constant 1 : index
    %c0_56 = arith.constant 0 : index
    %89 = vector.load %arg3[%c1_55, %c0_56] : memref<2x112xf32, #tpu.memory_space<vmem>>, vector<1x112xf32>
    %90 = arith.mulf %76, %88 : vector<1x112xf32>
    %91 = arith.subf %89, %90 : vector<1x112xf32>
    %92 = vector.broadcast %88 : vector<1x112xf32> to vector<28x112xf32>
    %93 = arith.mulf %34, %92 : vector<28x112xf32>
    %94 = vector.broadcast %91 : vector<1x112xf32> to vector<28x112xf32>
    %95 = arith.addf %93, %94 : vector<28x112xf32>
    %cst_57 = arith.constant 0.000000e+00 : f32
    %96 = vector.broadcast %cst_57 : f32 to vector<28x112xf32>
    %97 = arith.maximumf %95, %96 : vector<28x112xf32>
    %c0_58 = arith.constant 0 : index
    %c0_59 = arith.constant 0 : index
    %98 = vector.load %arg4[%c0_58, %c0_59] : memref<28x112xf32, #tpu.memory_space<vmem>>, vector<28x112xf32>
    tpu.vector_store %arg4[%c0_58, %c0_59], %97 {strides = array<i32>} : memref<28x112xf32, #tpu.memory_space<vmem>>, vector<28x112xf32>,
    return
  }
  func.func @transform_0(%arg0: i32) -> (i32, i32) {
    %c0_i32 = arith.constant 0 : i32
    %c0_i32_0 = arith.constant 0 : i32
    %c0_i32_1 = arith.constant 0 : i32
    return %c0_i32, %c0_i32_0 : i32, i32
  }
  func.func @transform_1(%arg0: i32) -> (i32, i32, i32) {
    %c0_i32 = arith.constant 0 : i32
    %c0_i32_0 = arith.constant 0 : i32
    %c0_i32_1 = arith.constant 0 : i32
    %c0_i32_2 = arith.constant 0 : i32
    return %c0_i32, %c0_i32_0, %c0_i32_1 : i32, i32, i32
  }
  func.func @transform_2(%arg0: i32) -> (i32, i32) {
    %c0_i32 = arith.constant 0 : i32
    %c0_i32_0 = arith.constant 0 : i32
    %c0_i32_1 = arith.constant 0 : i32
    return %c0_i32, %c0_i32_0 : i32, i32
  }
  func.func @transform_3(%arg0: i32) -> (i32, i32) {
    %c0_i32 = arith.constant 0 : i32
    %c0_i32_0 = arith.constant 0 : i32
    %c0_i32_1 = arith.constant 0 : i32
    return %c0_i32, %c0_i32_0 : i32, i32
  }
}

</mosaic_0001>

<llo_original>
// kernel: tile.13
$region0: #{tile.13}
  #allocation0 [shape = 's32[1]{0}', space=sflag, size = 0x4, scoped, tag = 'scoped memory for tile.13']
  %s0 = inlined_call_operand.vmem [shape: f32[8], index: 0, kind: input, shape index: {}]
  %s1 = inlined_call_operand.vmem [shape: f32[14,8], index: 1, kind: output, shape index: {}]
  // Predicated region
  $region2: #{tile.13} parent=0 // pred_check
    _
  $region3: #{tile.13} parent=0 // pred_check_branch
    %3 = sbr.rel (0) target = $region5
  $region4: #{tile.13} parent=0 // pred_region
    _
  $region5: #{tile.13} parent=0 // pred_fallthru
    _
  %v4 = vld [vmem:[%s0] ss:$0 sm:$0xff]
  %5 = vst [vmem:[%s1] sm:$0xff] %v4
  %s6 = scalar_lea.vmem %s1, 8
  %7 = vst [vmem:[%s6] sm:$0xff] %v4

// kernel: tile.18
$region0: #{tile.18}
  %s0 = inlined_call_operand.vmem [shape: f32[14,8], index: 0, kind: input, shape index: {}]
  %s1 = inlined_call_operand.vmem [shape: f32[1,112], index: 1, kind: output, shape index: {}]
  $region1: #{tile.18} parent=0
    #allocation0 [shape = 'u8[4096]{0}', space=vmem, size = 0x1000, scoped, tag = 'scoped mem for output reshape']
    %v2 = vld [vmem:[%s0] sm:$0x1]
    %vm3 = vcmask 64512
    %4 = vst.msk [vmem:[#allocation0] sm:$0x1] %vm3, %v2
    %s5 = scalar_lea.vmem %s0, 13
    %v6 = vld [vmem:[%s5] sm:$0x1]
    %7 = vrot.lane.b32.xlu0 %v6, 104
    %v8 = vpop.permute.xlu0 %7
    %vm9 = vcmask 917312
    %10 = vst.msk [vmem:[#allocation0] sm:$0x1] %vm9, %v8
    %s11 = scalar_lea.vmem %s0, 12
    %v12 = vld [vmem:[%s11] sm:$0x1]
    %13 = vrot.lane.b32.xlu0 %v12, 96
    %v14 = vpop.permute.xlu0 %13
    %vm15 = vcmask 851712
    %16 = vst.msk [vmem:[#allocation0] sm:$0x1] %vm15, %v14
    %s17 = scalar_lea.vmem %s0, 11
    %v18 = vld [vmem:[%s17] sm:$0x1]
    %19 = vrot.lane.b32.xlu0 %v18, 88
    %v20 = vpop.permute.xlu0 %19
    %vm21 = vcmask 786112
    %22 = vst.msk [vmem:[#allocation0] sm:$0x1] %vm21, %v20
    %s23 = scalar_lea.vmem %s0, 10
    %v24 = vld [vmem:[%s23] sm:$0x1]
    %25 = vrot.lane.b32.xlu0 %v24, 80
    %v26 = vpop.permute.xlu0 %25
    %vm27 = vcmask 720512
    %28 = vst.msk [vmem:[#allocation0] sm:$0x1] %vm27, %v26
    %s29 = scalar_lea.vmem %s0, 9
    %v30 = vld [vmem:[%s29] sm:$0x1]
    %31 = vrot.lane.b32.xlu0 %v30, 72
    %v32 = vpop.permute.xlu0 %31
    %vm33 = vcmask 654912
    %34 = vst.msk [vmem:[#allocation0] sm:$0x1] %vm33, %v32
    %s35 = scalar_lea.vmem %s0, 8
    %v36 = vld [vmem:[%s35] sm:$0x1]
    %37 = vrot.lane.b32.xlu0 %v36, 64
    %v38 = vpop.permute.xlu0 %37
    %vm39 = vcmask 589312
    %40 = vst.msk [vmem:[#allocation0] sm:$0x1] %vm39, %v38
    %s41 = scalar_lea.vmem %s0, 7
    %v42 = vld [vmem:[%s41] sm:$0x1]
    %43 = vrot.lane.b32.xlu0 %v42, 56
    %v44 = vpop.permute.xlu0 %43
    %vm45 = vcmask 523712
    %46 = vst.msk [vmem:[#allocation0] sm:$0x1] %vm45, %v44
    %s47 = scalar_lea.vmem %s0, 6
    %v48 = vld [vmem:[%s47] sm:$0x1]
    %49 = vrot.lane.b32.xlu0 %v48, 48
    %v50 = vpop.permute.xlu0 %49
    %vm51 = vcmask 458112
    %52 = vst.msk [vmem:[#allocation0] sm:$0x1] %vm51, %v50
    %s53 = scalar_lea.vmem %s0, 5
    %v54 = vld [vmem:[%s53] sm:$0x1]
    %55 = vrot.lane.b32.xlu0 %v54, 40
    %v56 = vpop.permute.xlu0 %55
    %vm57 = vcmask 392512
    %58 = vst.msk [vmem:[#allocation0] sm:$0x1] %vm57, %v56
    %s59 = scalar_lea.vmem %s0, 4
    %v60 = vld [vmem:[%s59] sm:$0x1]
    %61 = vrot.lane.b32.xlu0 %v60, 32
    %v62 = vpop.permute.xlu0 %61
    %vm63 = vcmask 326912
    %64 = vst.msk [vmem:[#allocation0] sm:$0x1] %vm63, %v62
    %s65 = scalar_lea.vmem %s0, 3
    %v66 = vld [vmem:[%s65] sm:$0x1]
    %67 = vrot.lane.b32.xlu0 %v66, 24
    %v68 = vpop.permute.xlu0 %67
    %vm69 = vcmask 261312
    %70 = vst.msk [vmem:[#allocation0] sm:$0x1] %vm69, %v68
    %s71 = scalar_lea.vmem %s0, 2
    %v72 = vld [vmem:[%s71] sm:$0x1]
    %73 = vrot.lane.b32.xlu0 %v72, 16
    %v74 = vpop.permute.xlu0 %73
    %vm75 = vcmask 195712
    %76 = vst.msk [vmem:[#allocation0] sm:$0x1] %vm75, %v74
    %s77 = scalar_lea.vmem %s0, 1
    %v78 = vld [vmem:[%s77] sm:$0x1]
    %79 = vrot.lane.b32.xlu0 %v78, 8
    %v80 = vpop.permute.xlu0 %79
    %vm81 = vcmask 130112
    %82 = vst.msk [vmem:[#allocation0] sm:$0x1] %vm81, %v80
    %s84 = sshllo.u32 0, 1
    %v86 = vld [vmem:[#allocation0] sm:%s84]
    %s87 = sshllo.u32 0, 1
    %88 = vst [vmem:[%s1] sm:%s87] %v86

// kernel: block_forward.1
$region0: #{block_forward.1}
  #allocation0 [shape = 'u32[]', space=smem, size = 0x4, offset = 0x4, fixed_abs, tag = 'smem constant byte address 0x4 - core index']
  #allocation1 [shape = 'u32[144,128]{1,0:T(1,128)}', space=vmem, size = 0x12000, scoped, tag = 'internal scratch']
  #allocation2 [shape = 'f32[28,112]{1,0:T(8,128)}', space=vmem, size = 0x4000, scoped, tag = 'scratch operand']
  %s0 = inlined_call_operand.vmem [shape: f32[32,64], index: 0, kind: input, shape index: {}]
  %s1 = inlined_call_operand.vmem [shape: f32[3,64,112], index: 1, kind: input, shape index: {}]
  %s2 = inlined_call_operand.vmem [shape: f32[2,112], index: 2, kind: input, shape index: {}]
  %s3 = inlined_call_operand.vmem [shape: f32[28,112], index: 3, kind: output, shape index: {}]
  %s4 = sld [smem:[#allocation0]]
  $region22: #{block_forward.1} parent=0
    _
  %s6 = ssub.s32 1, %s4
  %s7 = scalar_select 0, %s6, %s4
  // Predicated region
  $region2: #{block_forward.1} parent=0 // pred_check
    _
  $region3: #{block_forward.1} parent=0 // pred_check_branch
    %9 = sbr.rel (0) target = $region5
  $region4: #{block_forward.1} parent=0 // pred_region
    _
  $region5: #{block_forward.1} parent=0 // pred_fallthru
    _
  // Predicated region
  $region6: #{block_forward.1} parent=0 // pred_check
    _
  $region7: #{block_forward.1} parent=0 // pred_check_branch
    %11 = sbr.rel (0) target = $region9
  $region8: #{block_forward.1} parent=0 // pred_region
    _
  $region9: #{block_forward.1} parent=0 // pred_fallthru
    _
  // Predicated region
  $region10: #{block_forward.1} parent=0 // pred_check
    _
  $region11: #{block_forward.1} parent=0 // pred_check_branch
    %13 = sbr.rel (0) target = $region13
  $region12: #{block_forward.1} parent=0 // pred_region
    _
  $region13: #{block_forward.1} parent=0 // pred_fallthru
    _
  %v14 = vld [vmem:[%s0] sm:$0xff]
  %v15 = vld [vmem:[%s0 + $0x8] sm:$0x3f]
  %v16 = vld [vmem:[%s1] sm:$0xff]
  %v17 = vld [vmem:[%s1 + $0x8] sm:$0xff]
  %v18 = vld [vmem:[%s1 + $0x10] sm:$0xff]
  %v19 = vld [vmem:[%s1 + $0x18] sm:$0xff]
  %v20 = vld [vmem:[%s1 + $0x20] sm:$0xff]
  %v21 = vld [vmem:[%s1 + $0x28] sm:$0xff]
  %v22 = vld [vmem:[%s1 + $0x30] sm:$0xff]
  %v23 = vld [vmem:[%s1 + $0x38] sm:$0xff]
  %v24 = vld [vmem:[%s0 + $0x1] sm:$0xff]
  %v25 = vld [vmem:[%s0 + $0x9] sm:$0x3f]
  %s26 = scalar_lea.vmem %s1, 64
  %v27 = vld [vmem:[%s26] sm:$0xff]
  %v28 = vld [vmem:[%s26 + $0x8] sm:$0xff]
  %v29 = vld [vmem:[%s26 + $0x10] sm:$0xff]
  %v30 = vld [vmem:[%s26 + $0x18] sm:$0xff]
  %v31 = vld [vmem:[%s26 + $0x20] sm:$0xff]
  %v32 = vld [vmem:[%s26 + $0x28] sm:$0xff]
  %v33 = vld [vmem:[%s26 + $0x30] sm:$0xff]
  %v34 = vld [vmem:[%s26 + $0x38] sm:$0xff]
  %vm35 = vcmask 523264
  %v37 = vsel %vm35, %v24, 0
  %v40 = vsel %vm35, %v25, 0
  %42 = vmatprep.subr.mxu0 0.0
  %43 = vmatpush1.msra.mxu0 %v27
  %44 = vmatprep.subr.mxu0 0.0
  %45 = vmatpush1.msra.mxu0 %v28
  %46 = vmatprep.subr.mxu0 0.0
  %47 = vmatpush1.msra.mxu0 %v29
  %48 = vmatprep.subr.mxu0 0.0
  %49 = vmatpush1.msra.mxu0 %v30
  %50 = vmatprep.subr.mxu0 0.0
  %51 = vmatpush1.msra.mxu0 %v31
  %52 = vmatprep.subr.mxu0 0.0
  %53 = vmatpush1.msra.mxu0 %v32
  %54 = vmatprep.subr.mxu0 0.0
  %55 = vmatpush1.msra.mxu0 %v33
  %56 = vmatprep.subr.mxu0 0.0
  %57 = vmatpush1.msra.mxu0 %v34
  %58 = vmatprep.subr.mxu0 0.0
  %59 = vmatpush1.msra.mxu0 0.0
  %60 = vmatprep.subr.mxu0 0.0
  %61 = vmatpush1.msra.mxu0 0.0
  %62 = vmatprep.subr.mxu0 0.0
  %63 = vmatpush1.msra.mxu0 0.0
  %64 = vmatprep.subr.mxu0 0.0
  %65 = vmatpush1.msra.mxu0 0.0
  %66 = vmatprep.subr.mxu0 0.0
  %67 = vmatpush1.msra.mxu0 0.0
  %68 = vmatprep.subr.mxu0 0.0
  %69 = vmatpush1.msra.mxu0 0.0
  %70 = vmatprep.subr.mxu0 0.0
  %71 = vmatpush1.msra.mxu0 0.0
  %72 = vmatprep.subr.mxu0 0.0
  %73 = vmatpush1.msra.mxu0 0.0
  %74 = vmatprep.subr.mxu0 0.0
  %75 = vmatpush1.msra.mxu0 0.0
  %76 = vmatprep.subr.mxu0 0.0
  %77 = vmatpush1.msra.mxu0 0.0
  %78 = vmatprep.subr.mxu0 0.0
  %79 = vmatpush1.msra.mxu0 0.0
  %80 = vmatprep.subr.mxu0 0.0
  %81 = vmatpush1.msra.mxu0 0.0
  %82 = vmatprep.subr.mxu0 0.0
  %83 = vmatpush1.msra.mxu0 0.0
  %84 = vmatprep.subr.mxu0 0.0
  %85 = vmatpush1.msra.mxu0 0.0
  %86 = vmatprep.subr.mxu0 0.0
  %87 = vmatpush1.msra.mxu0 0.0
  %88 = vmatprep.subr.mxu0 0.0
  %89 = vmatpush1.msra.mxu0 0.0
  %90 = vmatprep.subr.mxu0 0.0
  %91 = vmatpush1.msra.mxu0 0.0
  %92 = vmatprep.subr.mxu0 0.0
  %93 = vmatpush1.msra.mxu0 0.0
  %94 = vmatprep.subr.mxu0 0.0
  %95 = vmatpush1.msra.mxu0 0.0
  %96 = vmatprep.subr.mxu0 0.0
  %97 = vmatpush1.msra.mxu0 0.0
  %98 = vmatprep.subr.mxu0 0.0
  %99 = vmatpush1.msra.mxu0 0.0
  %100 = vmatprep.subr.mxu0 0.0
  %101 = vmatpush1.msra.mxu0 0.0
  %102 = vmatprep.subr.mxu0 0.0
  %103 = vmatpush1.msra.mxu0 0.0
  %104 = vmatprep.subr.mxu0 0.0
  %105 = vmatpush1.msra.mxu0 0.0
  %106 = vmatprep.mubr.f32.mxu0 0.0
  %107 = vmatmul.mubr.f32.gmra.mrb[0].mxu0 %v37
  %v108 = vpop.f32.mrb[0].mxu0
  %v109 = vadd.f32 0.0, %v108
  %v110 = vpop.f32.mrb[0].mxu0
  %111 = vmatprep.mubr.f32.mxu0 0.0
  %112 = vmatmul.mubr.f32.gmra.mrb[0].mxu0 %v40
  %v113 = vpop.f32.mrb[0].mxu0
  %v114 = vadd.f32 0.0, %v113
  %v115 = vpop.f32.mrb[0].mxu0
  %116 = vdwg.mxu0
  %v118 = vsel %vm35, %v14, 0
  %v121 = vsel %vm35, %v15, 0
  %123 = vmatprep.subr.mxu0 0.0
  %124 = vmatpush1.msra.mxu0 %v16
  %125 = vmatprep.subr.mxu0 0.0
  %126 = vmatpush1.msra.mxu0 %v17
  %127 = vmatprep.subr.mxu0 0.0
  %128 = vmatpush1.msra.mxu0 %v18
  %129 = vmatprep.subr.mxu0 0.0
  %130 = vmatpush1.msra.mxu0 %v19
  %131 = vmatprep.subr.mxu0 0.0
  %132 = vmatpush1.msra.mxu0 %v20
  %133 = vmatprep.subr.mxu0 0.0
  %134 = vmatpush1.msra.mxu0 %v21
  %135 = vmatprep.subr.mxu0 0.0
  %136 = vmatpush1.msra.mxu0 %v22
  %137 = vmatprep.subr.mxu0 0.0
  %138 = vmatpush1.msra.mxu0 %v23
  %139 = vmatprep.subr.mxu0 0.0
  %140 = vmatpush1.msra.mxu0 0.0
  %141 = vmatprep.subr.mxu0 0.0
  %142 = vmatpush1.msra.mxu0 0.0
  %143 = vmatprep.subr.mxu0 0.0
  %144 = vmatpush1.msra.mxu0 0.0
  %145 = vmatprep.subr.mxu0 0.0
  %146 = vmatpush1.msra.mxu0 0.0
  %147 = vmatprep.subr.mxu0 0.0
  %148 = vmatpush1.msra.mxu0 0.0
  %149 = vmatprep.subr.mxu0 0.0
  %150 = vmatpush1.msra.mxu0 0.0
  %151 = vmatprep.subr.mxu0 0.0
  %152 = vmatpush1.msra.mxu0 0.0
  %153 = vmatprep.subr.mxu0 0.0
  %154 = vmatpush1.msra.mxu0 0.0
  %155 = vmatprep.subr.mxu0 0.0
  %156 = vmatpush1.msra.mxu0 0.0
  %157 = vmatprep.subr.mxu0 0.0
  %158 = vmatpush1.msra.mxu0 0.0
  %159 = vmatprep.subr.mxu0 0.0
  %160 = vmatpush1.msra.mxu0 0.0
  %161 = vmatprep.subr.mxu0 0.0
  %162 = vmatpush1.msra.mxu0 0.0
  %163 = vmatprep.subr.mxu0 0.0
  %164 = vmatpush1.msra.mxu0 0.0
  %165 = vmatprep.subr.mxu0 0.0
  %166 = vmatpush1.msra.mxu0 0.0
  %167 = vmatprep.subr.mxu0 0.0
  %168 = vmatpush1.msra.mxu0 0.0
  %169 = vmatprep.subr.mxu0 0.0
  %170 = vmatpush1.msra.mxu0 0.0
  %171 = vmatprep.subr.mxu0 0.0
  %172 = vmatpush1.msra.mxu0 0.0
  %173 = vmatprep.subr.mxu0 0.0
  %174 = vmatpush1.msra.mxu0 0.0
  %175 = vmatprep.subr.mxu0 0.0
  %176 = vmatpush1.msra.mxu0 0.0
  %177 = vmatprep.subr.mxu0 0.0
  %178 = vmatpush1.msra.mxu0 0.0
  %179 = vmatprep.subr.mxu0 0.0
  %180 = vmatpush1.msra.mxu0 0.0
  %181 = vmatprep.subr.mxu0 0.0
  %182 = vmatpush1.msra.mxu0 0.0
  %183 = vmatprep.subr.mxu0 0.0
  %184 = vmatpush1.msra.mxu0 0.0
  %185 = vmatprep.subr.mxu0 0.0
  %186 = vmatpush1.msra.mxu0 0.0
  %187 = vmatprep.mubr.f32.mxu0 0.0
  %188 = vmatmul.mubr.f32.gmra.mrb[0].mxu0 %v118
  %v189 = vpop.f32.mrb[0].mxu0
  %v190 = vadd.f32 %v109, %v189
  %v191 = vpop.f32.mrb[0].mxu0
  %192 = vmatprep.mubr.f32.mxu0 0.0
  %193 = vmatmul.mubr.f32.gmra.mrb[0].mxu0 %v121
  %v194 = vpop.f32.mrb[0].mxu0
  %v195 = vadd.f32 %v114, %v194
  %v196 = vpop.f32.mrb[0].mxu0
  %197 = vdwg.mxu0
  %v198 = vld [vmem:[%s0 + $0x2] sm:$0xff]
  %v199 = vld [vmem:[%s0 + $0xa] sm:$0x3f]
  %s200 = scalar_lea.vmem %s1, 128
  %v201 = vld [vmem:[%s200] sm:$0xff]
  %v202 = vld [vmem:[%s200 + $0x8] sm:$0xff]
  %v203 = vld [vmem:[%s200 + $0x10] sm:$0xff]
  %v204 = vld [vmem:[%s200 + $0x18] sm:$0xff]
  %v205 = vld [vmem:[%s200 + $0x20] sm:$0xff]
  %v206 = vld [vmem:[%s200 + $0x28] sm:$0xff]
  %v207 = vld [vmem:[%s200 + $0x30] sm:$0xff]
  %v208 = vld [vmem:[%s200 + $0x38] sm:$0xff]
  %v210 = vsel %vm35, %v198, 0
  %v213 = vsel %vm35, %v199, 0
  %215 = vmatprep.subr.mxu0 0.0
  %216 = vmatpush1.msra.mxu0 %v201
  %217 = vmatprep.subr.mxu0 0.0
  %218 = vmatpush1.msra.mxu0 %v202
  %219 = vmatprep.subr.mxu0 0.0
  %220 = vmatpush1.msra.mxu0 %v203
  %221 = vmatprep.subr.mxu0 0.0
  %222 = vmatpush1.msra.mxu0 %v204
  %223 = vmatprep.subr.mxu0 0.0
  %224 = vmatpush1.msra.mxu0 %v205
  %225 = vmatprep.subr.mxu0 0.0
  %226 = vmatpush1.msra.mxu0 %v206
  %227 = vmatprep.subr.mxu0 0.0
  %228 = vmatpush1.msra.mxu0 %v207
  %229 = vmatprep.subr.mxu0 0.0
  %230 = vmatpush1.msra.mxu0 %v208
  %231 = vmatprep.subr.mxu0 0.0
  %232 = vmatpush1.msra.mxu0 0.0
  %233 = vmatprep.subr.mxu0 0.0
  %234 = vmatpush1.msra.mxu0 0.0
  %235 = vmatprep.subr.mxu0 0.0
  %236 = vmatpush1.msra.mxu0 0.0
  %237 = vmatprep.subr.mxu0 0.0
  %238 = vmatpush1.msra.mxu0 0.0
  %239 = vmatprep.subr.mxu0 0.0
  %240 = vmatpush1.msra.mxu0 0.0
  %241 = vmatprep.subr.mxu0 0.0
  %242 = vmatpush1.msra.mxu0 0.0
  %243 = vmatprep.subr.mxu0 0.0
  %244 = vmatpush1.msra.mxu0 0.0
  %245 = vmatprep.subr.mxu0 0.0
  %246 = vmatpush1.msra.mxu0 0.0
  %247 = vmatprep.subr.mxu0 0.0
  %248 = vmatpush1.msra.mxu0 0.0
  %249 = vmatprep.subr.mxu0 0.0
  %250 = vmatpush1.msra.mxu0 0.0
  %251 = vmatprep.subr.mxu0 0.0
  %252 = vmatpush1.msra.mxu0 0.0
  %253 = vmatprep.subr.mxu0 0.0
  %254 = vmatpush1.msra.mxu0 0.0
  %255 = vmatprep.subr.mxu0 0.0
  %256 = vmatpush1.msra.mxu0 0.0
  %257 = vmatprep.subr.mxu0 0.0
  %258 = vmatpush1.msra.mxu0 0.0
  %259 = vmatprep.subr.mxu0 0.0
  %260 = vmatpush1.msra.mxu0 0.0
  %261 = vmatprep.subr.mxu0 0.0
  %262 = vmatpush1.msra.mxu0 0.0
  %263 = vmatprep.subr.mxu0 0.0
  %264 = vmatpush1.msra.mxu0 0.0
  %265 = vmatprep.subr.mxu0 0.0
  %266 = vmatpush1.msra.mxu0 0.0
  %267 = vmatprep.subr.mxu0 0.0
  %268 = vmatpush1.msra.mxu0 0.0
  %269 = vmatprep.subr.mxu0 0.0
  %270 = vmatpush1.msra.mxu0 0.0
  %271 = vmatprep.subr.mxu0 0.0
  %272 = vmatpush1.msra.mxu0 0.0
  %273 = vmatprep.subr.mxu0 0.0
  %274 = vmatpush1.msra.mxu0 0.0
  %275 = vmatprep.subr.mxu0 0.0
  %276 = vmatpush1.msra.mxu0 0.0
  %277 = vmatprep.subr.mxu0 0.0
  %278 = vmatpush1.msra.mxu0 0.0
  %279 = vmatprep.mubr.f32.mxu0 0.0
  %280 = vmatmul.mubr.f32.gmra.mrb[0].mxu0 %v210
  %v281 = vpop.f32.mrb[0].mxu0
  %v282 = vadd.f32 0.0, %v281
  %v283 = vpop.f32.mrb[0].mxu0
  %284 = vmatprep.mubr.f32.mxu0 0.0
  %285 = vmatmul.mubr.f32.gmra.mrb[0].mxu0 %v213
  %v286 = vpop.f32.mrb[0].mxu0
  %v287 = vadd.f32 0.0, %v286
  %v288 = vpop.f32.mrb[0].mxu0
  %289 = vdwg.mxu0
  %v290 = vadd.f32 %v190, %v282
  %v291 = vadd.f32 %v195, %v287
  %vm292 = vcmask 916480
  %293 = vst.msk [vmem:[#allocation2] sm:$0xff] %vm292, %v290
  %vm294 = vcmask 914432
  %295 = vst.msk [vmem:[#allocation2 + $0x8] sm:$0x3f] %vm294, %v291
  %v296 = vld [vmem:[%s0 + $0x10] sm:$0xff]
  %v297 = vld [vmem:[%s0 + $0x18] sm:$0x3f]
  %v298 = vld [vmem:[%s1] sm:$0xff]
  %v299 = vld [vmem:[%s1 + $0x8] sm:$0xff]
  %v300 = vld [vmem:[%s1 + $0x10] sm:$0xff]
  %v301 = vld [vmem:[%s1 + $0x18] sm:$0xff]
  %v302 = vld [vmem:[%s1 + $0x20] sm:$0xff]
  %v303 = vld [vmem:[%s1 + $0x28] sm:$0xff]
  %v304 = vld [vmem:[%s1 + $0x30] sm:$0xff]
  %v305 = vld [vmem:[%s1 + $0x38] sm:$0xff]
  %v306 = vld [vmem:[%s0 + $0x11] sm:$0xff]
  %v307 = vld [vmem:[%s0 + $0x19] sm:$0x3f]
  %v308 = vld [vmem:[%s26] sm:$0xff]
  %v309 = vld [vmem:[%s26 + $0x8] sm:$0xff]
  %v310 = vld [vmem:[%s26 + $0x10] sm:$0xff]
  %v311 = vld [vmem:[%s26 + $0x18] sm:$0xff]
  %v312 = vld [vmem:[%s26 + $0x20] sm:$0xff]
  %v313 = vld [vmem:[%s26 + $0x28] sm:$0xff]
  %v314 = vld [vmem:[%s26 + $0x30] sm:$0xff]
  %v315 = vld [vmem:[%s26 + $0x38] sm:$0xff]
  %v317 = vsel %vm35, %v306, 0
  %v320 = vsel %vm35, %v307, 0
  %322 = vmatprep.subr.mxu0 0.0
  %323 = vmatpush1.msra.mxu0 %v308
  %324 = vmatprep.subr.mxu0 0.0
  %325 = vmatpush1.msra.mxu0 %v309
  %326 = vmatprep.subr.mxu0 0.0
  %327 = vmatpush1.msra.mxu0 %v310
  %328 = vmatprep.subr.mxu0 0.0
  %329 = vmatpush1.msra.mxu0 %v311
  %330 = vmatprep.subr.mxu0 0.0
  %331 = vmatpush1.msra.mxu0 %v312
  %332 = vmatprep.subr.mxu0 0.0
  %333 = vmatpush1.msra.mxu0 %v313
  %334 = vmatprep.subr.mxu0 0.0
  %335 = vmatpush1.msra.mxu0 %v314
  %336 = vmatprep.subr.mxu0 0.0
  %337 = vmatpush1.msra.mxu0 %v315
  %338 = vmatprep.subr.mxu0 0.0
  %339 = vmatpush1.msra.mxu0 0.0
  %340 = vmatprep.subr.mxu0 0.0
  %341 = vmatpush1.msra.mxu0 0.0
  %342 = vmatprep.subr.mxu0 0.0
  %343 = vmatpush1.msra.mxu0 0.0
  %344 = vmatprep.subr.mxu0 0.0
  %345 = vmatpush1.msra.mxu0 0.0
  %346 = vmatprep.subr.mxu0 0.0
  %347 = vmatpush1.msra.mxu0 0.0
  %348 = vmatprep.subr.mxu0 0.0
  %349 = vmatpush1.msra.mxu0 0.0
  %350 = vmatprep.subr.mxu0 0.0
  %351 = vmatpush1.msra.mxu0 0.0
  %352 = vmatprep.subr.mxu0 0.0
  %353 = vmatpush1.msra.mxu0 0.0
  %354 = vmatprep.subr.mxu0 0.0
  %355 = vmatpush1.msra.mxu0 0.0
  %356 = vmatprep.subr.mxu0 0.0
  %357 = vmatpush1.msra.mxu0 0.0
  %358 = vmatprep.subr.mxu0 0.0
  %359 = vmatpush1.msra.mxu0 0.0
  %360 = vmatprep.subr.mxu0 0.0
  %361 = vmatpush1.msra.mxu0 0.0
  %362 = vmatprep.subr.mxu0 0.0
  %363 = vmatpush1.msra.mxu0 0.0
  %364 = vmatprep.subr.mxu0 0.0
  %365 = vmatpush1.msra.mxu0 0.0
  %366 = vmatprep.subr.mxu0 0.0
  %367 = vmatpush1.msra.mxu0 0.0
  %368 = vmatprep.subr.mxu0 0.0
  %369 = vmatpush1.msra.mxu0 0.0
  %370 = vmatprep.subr.mxu0 0.0
  %371 = vmatpush1.msra.mxu0 0.0
  %372 = vmatprep.subr.mxu0 0.0
  %373 = vmatpush1.msra.mxu0 0.0
  %374 = vmatprep.subr.mxu0 0.0
  %375 = vmatpush1.msra.mxu0 0.0
  %376 = vmatprep.subr.mxu0 0.0
  %377 = vmatpush1.msra.mxu0 0.0
  %378 = vmatprep.subr.mxu0 0.0
  %379 = vmatpush1.msra.mxu0 0.0
  %380 = vmatprep.subr.mxu0 0.0
  %381 = vmatpush1.msra.mxu0 0.0
  %382 = vmatprep.subr.mxu0 0.0
  %383 = vmatpush1.msra.mxu0 0.0
  %384 = vmatprep.subr.mxu0 0.0
  %385 = vmatpush1.msra.mxu0 0.0
  %386 = vmatprep.mubr.f32.mxu0 0.0
  %387 = vmatmul.mubr.f32.gmra.mrb[0].mxu0 %v317
  %v388 = vpop.f32.mrb[0].mxu0
  %v389 = vadd.f32 0.0, %v388
  %v390 = vpop.f32.mrb[0].mxu0
  %391 = vmatprep.mubr.f32.mxu0 0.0
  %392 = vmatmul.mubr.f32.gmra.mrb[0].mxu0 %v320
  %v393 = vpop.f32.mrb[0].mxu0
  %v394 = vadd.f32 0.0, %v393
  %v395 = vpop.f32.mrb[0].mxu0
  %396 = vdwg.mxu0
  %v398 = vsel %vm35, %v296, 0
  %v401 = vsel %vm35, %v297, 0
  %403 = vmatprep.subr.mxu0 0.0
  %404 = vmatpush1.msra.mxu0 %v298
  %405 = vmatprep.subr.mxu0 0.0
  %406 = vmatpush1.msra.mxu0 %v299
  %407 = vmatprep.subr.mxu0 0.0
  %408 = vmatpush1.msra.mxu0 %v300
  %409 = vmatprep.subr.mxu0 0.0
  %410 = vmatpush1.msra.mxu0 %v301
  %411 = vmatprep.subr.mxu0 0.0
  %412 = vmatpush1.msra.mxu0 %v302
  %413 = vmatprep.subr.mxu0 0.0
  %414 = vmatpush1.msra.mxu0 %v303
  %415 = vmatprep.subr.mxu0 0.0
  %416 = vmatpush1.msra.mxu0 %v304
  %417 = vmatprep.subr.mxu0 0.0
  %418 = vmatpush1.msra.mxu0 %v305
  %419 = vmatprep.subr.mxu0 0.0
  %420 = vmatpush1.msra.mxu0 0.0
  %421 = vmatprep.subr.mxu0 0.0
  %422 = vmatpush1.msra.mxu0 0.0
  %423 = vmatprep.subr.mxu0 0.0
  %424 = vmatpush1.msra.mxu0 0.0
  %425 = vmatprep.subr.mxu0 0.0
  %426 = vmatpush1.msra.mxu0 0.0
  %427 = vmatprep.subr.mxu0 0.0
  %428 = vmatpush1.msra.mxu0 0.0
  %429 = vmatprep.subr.mxu0 0.0
  %430 = vmatpush1.msra.mxu0 0.0
  %431 = vmatprep.subr.mxu0 0.0
  %432 = vmatpush1.msra.mxu0 0.0
  %433 = vmatprep.subr.mxu0 0.0
  %434 = vmatpush1.msra.mxu0 0.0
  %435 = vmatprep.subr.mxu0 0.0
  %436 = vmatpush1.msra.mxu0 0.0
  %437 = vmatprep.subr.mxu0 0.0
  %438 = vmatpush1.msra.mxu0 0.0
  %439 = vmatprep.subr.mxu0 0.0
  %440 = vmatpush1.msra.mxu0 0.0
  %441 = vmatprep.subr.mxu0 0.0
  %442 = vmatpush1.msra.mxu0 0.0
  %443 = vmatprep.subr.mxu0 0.0
  %444 = vmatpush1.msra.mxu0 0.0
  %445 = vmatprep.subr.mxu0 0.0
  %446 = vmatpush1.msra.mxu0 0.0
  %447 = vmatprep.subr.mxu0 0.0
  %448 = vmatpush1.msra.mxu0 0.0
  %449 = vmatprep.subr.mxu0 0.0
  %450 = vmatpush1.msra.mxu0 0.0
  %451 = vmatprep.subr.mxu0 0.0
  %452 = vmatpush1.msra.mxu0 0.0
  %453 = vmatprep.subr.mxu0 0.0
  %454 = vmatpush1.msra.mxu0 0.0
  %455 = vmatprep.subr.mxu0 0.0
  %456 = vmatpush1.msra.mxu0 0.0
  %457 = vmatprep.subr.mxu0 0.0
  %458 = vmatpush1.msra.mxu0 0.0
  %459 = vmatprep.subr.mxu0 0.0
  %460 = vmatpush1.msra.mxu0 0.0
  %461 = vmatprep.subr.mxu0 0.0
  %462 = vmatpush1.msra.mxu0 0.0
  %463 = vmatprep.subr.mxu0 0.0
  %464 = vmatpush1.msra.mxu0 0.0
  %465 = vmatprep.subr.mxu0 0.0
  %466 = vmatpush1.msra.mxu0 0.0
  %467 = vmatprep.mubr.f32.mxu0 0.0
  %468 = vmatmul.mubr.f32.gmra.mrb[0].mxu0 %v398
  %v469 = vpop.f32.mrb[0].mxu0
  %v470 = vadd.f32 %v389, %v469
  %v471 = vpop.f32.mrb[0].mxu0
  %472 = vmatprep.mubr.f32.mxu0 0.0
  %473 = vmatmul.mubr.f32.gmra.mrb[0].mxu0 %v401
  %v474 = vpop.f32.mrb[0].mxu0
  %v475 = vadd.f32 %v394, %v474
  %v476 = vpop.f32.mrb[0].mxu0
  %477 = vdwg.mxu0
  %v478 = vld [vmem:[%s0 + $0x12] sm:$0xff]
  %v479 = vld [vmem:[%s0 + $0x1a] sm:$0x3f]
  %v480 = vld [vmem:[%s200] sm:$0xff]
  %v481 = vld [vmem:[%s200 + $0x8] sm:$0xff]
  %v482 = vld [vmem:[%s200 + $0x10] sm:$0xff]
  %v483 = vld [vmem:[%s200 + $0x18] sm:$0xff]
  %v484 = vld [vmem:[%s200 + $0x20] sm:$0xff]
  %v485 = vld [vmem:[%s200 + $0x28] sm:$0xff]
  %v486 = vld [vmem:[%s200 + $0x30] sm:$0xff]
  %v487 = vld [vmem:[%s200 + $0x38] sm:$0xff]
  %v489 = vsel %vm35, %v478, 0
  %v492 = vsel %vm35, %v479, 0
  %494 = vmatprep.subr.mxu0 0.0
  %495 = vmatpush1.msra.mxu0 %v480
  %496 = vmatprep.subr.mxu0 0.0
  %497 = vmatpush1.msra.mxu0 %v481
  %498 = vmatprep.subr.mxu0 0.0
  %499 = vmatpush1.msra.mxu0 %v482
  %500 = vmatprep.subr.mxu0 0.0
  %501 = vmatpush1.msra.mxu0 %v483
  %502 = vmatprep.subr.mxu0 0.0
  %503 = vmatpush1.msra.mxu0 %v484
  %504 = vmatprep.subr.mxu0 0.0
  %505 = vmatpush1.msra.mxu0 %v485
  %506 = vmatprep.subr.mxu0 0.0
  %507 = vmatpush1.msra.mxu0 %v486
  %508 = vmatprep.subr.mxu0 0.0
  %509 = vmatpush1.msra.mxu0 %v487
  %510 = vmatprep.subr.mxu0 0.0
  %511 = vmatpush1.msra.mxu0 0.0
  %512 = vmatprep.subr.mxu0 0.0
  %513 = vmatpush1.msra.mxu0 0.0
  %514 = vmatprep.subr.mxu0 0.0
  %515 = vmatpush1.msra.mxu0 0.0
  %516 = vmatprep.subr.mxu0 0.0
  %517 = vmatpush1.msra.mxu0 0.0
  %518 = vmatprep.subr.mxu0 0.0
  %519 = vmatpush1.msra.mxu0 0.0
  %520 = vmatprep.subr.mxu0 0.0
  %521 = vmatpush1.msra.mxu0 0.0
  %522 = vmatprep.subr.mxu0 0.0
  %523 = vmatpush1.msra.mxu0 0.0
  %524 = vmatprep.subr.mxu0 0.0
  %525 = vmatpush1.msra.mxu0 0.0
  %526 = vmatprep.subr.mxu0 0.0
  %527 = vmatpush1.msra.mxu0 0.0
  %528 = vmatprep.subr.mxu0 0.0
  %529 = vmatpush1.msra.mxu0 0.0
  %530 = vmatprep.subr.mxu0 0.0
  %531 = vmatpush1.msra.mxu0 0.0
  %532 = vmatprep.subr.mxu0 0.0
  %533 = vmatpush1.msra.mxu0 0.0
  %534 = vmatprep.subr.mxu0 0.0
  %535 = vmatpush1.msra.mxu0 0.0
  %536 = vmatprep.subr.mxu0 0.0
  %537 = vmatpush1.msra.mxu0 0.0
  %538 = vmatprep.subr.mxu0 0.0
  %539 = vmatpush1.msra.mxu0 0.0
  %540 = vmatprep.subr.mxu0 0.0
  %541 = vmatpush1.msra.mxu0 0.0
  %542 = vmatprep.subr.mxu0 0.0
  %543 = vmatpush1.msra.mxu0 0.0
  %544 = vmatprep.subr.mxu0 0.0
  %545 = vmatpush1.msra.mxu0 0.0
  %546 = vmatprep.subr.mxu0 0.0
  %547 = vmatpush1.msra.mxu0 0.0
  %548 = vmatprep.subr.mxu0 0.0
  %549 = vmatpush1.msra.mxu0 0.0
  %550 = vmatprep.subr.mxu0 0.0
  %551 = vmatpush1.msra.mxu0 0.0
  %552 = vmatprep.subr.mxu0 0.0
  %553 = vmatpush1.msra.mxu0 0.0
  %554 = vmatprep.subr.mxu0 0.0
  %555 = vmatpush1.msra.mxu0 0.0
  %556 = vmatprep.subr.mxu0 0.0
  %557 = vmatpush1.msra.mxu0 0.0
  %558 = vmatprep.mubr.f32.mxu0 0.0
  %559 = vmatmul.mubr.f32.gmra.mrb[0].mxu0 %v489
  %v560 = vpop.f32.mrb[0].mxu0
  %v561 = vadd.f32 0.0, %v560
  %v562 = vpop.f32.mrb[0].mxu0
  %563 = vmatprep.mubr.f32.mxu0 0.0
  %564 = vmatmul.mubr.f32.gmra.mrb[0].mxu0 %v492
  %v565 = vpop.f32.mrb[0].mxu0
  %v566 = vadd.f32 0.0, %v565
  %v567 = vpop.f32.mrb[0].mxu0
  %568 = vdwg.mxu0
  %v569 = vadd.f32 %v470, %v561
  %v570 = vadd.f32 %v475, %v566
  %571 = vst.msk [vmem:[#allocation2 + $0xe] sm:$0xff] %vm292, %v569
  %572 = vst.msk [vmem:[#allocation2 + $0x16] sm:$0x3f] %vm294, %v570
  %v573 = vld [vmem:[#allocation2] sm:$0xff]
  %v574 = vld [vmem:[#allocation2 + $0x8] sm:$0xff]
  %v575 = vld [vmem:[#allocation2 + $0x10] sm:$0xff]
  %v576 = vld [vmem:[#allocation2 + $0x18] sm:$0xf]
  %v577 = vlaneseq
  %v578 = vshrl.u32 %v577, 7
  %v579 = vadd.s32 %v578, 8
  %v580 = vadd.s32 %v578, 16
  %v581 = vadd.s32 %v578, 24
  %v582 = vadd.s32 %v578, 32
  %v583 = vadd.s32 %v578, 40
  %v584 = vadd.s32 %v578, 48
  %v585 = vadd.s32 %v578, 56
  %v586 = vadd.s32 %v578, 64
  %v587 = vadd.s32 %v578, 72
  %v588 = vadd.s32 %v578, 80
  %v589 = vadd.s32 %v578, 88
  %v590 = vadd.s32 %v578, 96
  %v591 = vadd.s32 %v578, 104
  %vm592 = vcmp.lt.s32.totalorder %v578, 0
  %v593 = vsub.s32 0, %v578
  %v594 = vsel %vm592, %v593, %v578
  %v595 = vshrl.u32 %v594, 3
  %v596 = vand.u32 %v594, 7
  %v597 = vsub.s32 0, %v596
  %v598 = vsel %vm592, %v597, %v596
  %vm599 = vcmp.lt.s32.totalorder %v579, 0
  %v600 = vsub.s32 0, %v579
  %v601 = vsel %vm599, %v600, %v579
  %v602 = vshrl.u32 %v601, 3
  %v603 = vand.u32 %v601, 7
  %v604 = vsub.s32 0, %v603
  %v605 = vsel %vm599, %v604, %v603
  %vm606 = vcmp.lt.s32.totalorder %v580, 0
  %v607 = vsub.s32 0, %v580
  %v608 = vsel %vm606, %v607, %v580
  %v609 = vshrl.u32 %v608, 3
  %v610 = vand.u32 %v608, 7
  %v611 = vsub.s32 0, %v610
  %v612 = vsel %vm606, %v611, %v610
  %vm613 = vcmp.lt.s32.totalorder %v581, 0
  %v614 = vsub.s32 0, %v581
  %v615 = vsel %vm613, %v614, %v581
  %v616 = vshrl.u32 %v615, 3
  %v617 = vand.u32 %v615, 7
  %v618 = vsub.s32 0, %v617
  %v619 = vsel %vm613, %v618, %v617
  %vm620 = vcmp.lt.s32.totalorder %v582, 0
  %v621 = vsub.s32 0, %v582
  %v622 = vsel %vm620, %v621, %v582
  %v623 = vshrl.u32 %v622, 3
  %v624 = vand.u32 %v622, 7
  %v625 = vsub.s32 0, %v624
  %v626 = vsel %vm620, %v625, %v624
  %vm627 = vcmp.lt.s32.totalorder %v583, 0
  %v628 = vsub.s32 0, %v583
  %v629 = vsel %vm627, %v628, %v583
  %v630 = vshrl.u32 %v629, 3
  %v631 = vand.u32 %v629, 7
  %v632 = vsub.s32 0, %v631
  %v633 = vsel %vm627, %v632, %v631
  %vm634 = vcmp.lt.s32.totalorder %v584, 0
  %v635 = vsub.s32 0, %v584
  %v636 = vsel %vm634, %v635, %v584
  %v637 = vshrl.u32 %v636, 3
  %v638 = vand.u32 %v636, 7
  %v639 = vsub.s32 0, %v638
  %v640 = vsel %vm634, %v639, %v638
  %vm641 = vcmp.lt.s32.totalorder %v585, 0
  %v642 = vsub.s32 0, %v585
  %v643 = vsel %vm641, %v642, %v585
  %v644 = vshrl.u32 %v643, 3
  %v645 = vand.u32 %v643, 7
  %v646 = vsub.s32 0, %v645
  %v647 = vsel %vm641, %v646, %v645
  %vm648 = vcmp.lt.s32.totalorder %v586, 0
  %v649 = vsub.s32 0, %v586
  %v650 = vsel %vm648, %v649, %v586
  %v651 = vshrl.u32 %v650, 3
  %v652 = vand.u32 %v650, 7
  %v653 = vsub.s32 0, %v652
  %v654 = vsel %vm648, %v653, %v652
  %vm655 = vcmp.lt.s32.totalorder %v587, 0
  %v656 = vsub.s32 0, %v587
  %v657 = vsel %vm655, %v656, %v587
  %v658 = vshrl.u32 %v657, 3
  %v659 = vand.u32 %v657, 7
  %v660 = vsub.s32 0, %v659
  %v661 = vsel %vm655, %v660, %v659
  %vm662 = vcmp.lt.s32.totalorder %v588, 0
  %v663 = vsub.s32 0, %v588
  %v664 = vsel %vm662, %v663, %v588
  %v665 = vshrl.u32 %v664, 3
  %v666 = vand.u32 %v664, 7
  %v667 = vsub.s32 0, %v666
  %v668 = vsel %vm662, %v667, %v666
  %vm669 = vcmp.lt.s32.totalorder %v589, 0
  %v670 = vsub.s32 0, %v589
  %v671 = vsel %vm669, %v670, %v589
  %v672 = vshrl.u32 %v671, 3
  %v673 = vand.u32 %v671, 7
  %v674 = vsub.s32 0, %v673
  %v675 = vsel %vm669, %v674, %v673
  %vm676 = vcmp.lt.s32.totalorder %v590, 0
  %v677 = vsub.s32 0, %v590
  %v678 = vsel %vm676, %v677, %v590
  %v679 = vshrl.u32 %v678, 3
  %v680 = vand.u32 %v678, 7
  %v681 = vsub.s32 0, %v680
  %v682 = vsel %vm676, %v681, %v680
  %vm683 = vcmp.lt.s32.totalorder %v591, 0
  %v684 = vsub.s32 0, %v591
  %v685 = vsel %vm683, %v684, %v591
  %v686 = vshrl.u32 %v685, 3
  %v687 = vand.u32 %v685, 7
  %v688 = vsub.s32 0, %v687
  %v689 = vsel %vm683, %v688, %v687
  %vm690 = vcmp.ne.s32.totalorder %v598, 0
  %vm691 = vcmp.ne.s32.totalorder %v605, 0
  %vm692 = vcmp.ne.s32.totalorder %v612, 0
  %vm693 = vcmp.ne.s32.totalorder %v619, 0
  %vm694 = vcmp.ne.s32.totalorder %v626, 0
  %vm695 = vcmp.ne.s32.totalorder %v633, 0
  %vm696 = vcmp.ne.s32.totalorder %v640, 0
  %vm697 = vcmp.ne.s32.totalorder %v647, 0
  %vm698 = vcmp.ne.s32.totalorder %v654, 0
  %vm699 = vcmp.ne.s32.totalorder %v661, 0
  %vm700 = vcmp.ne.s32.totalorder %v668, 0
  %vm701 = vcmp.ne.s32.totalorder %v675, 0
  %vm702 = vcmp.ne.s32.totalorder %v682, 0
  %vm703 = vcmp.ne.s32.totalorder %v689, 0
  %vm704 = vcmp.lt.s32.totalorder %v598, 0
  %vm705 = vcmp.lt.s32.totalorder %v605, 0
  %vm706 = vcmp.lt.s32.totalorder %v612, 0
  %vm707 = vcmp.lt.s32.totalorder %v619, 0
  %vm708 = vcmp.lt.s32.totalorder %v626, 0
  %vm709 = vcmp.lt.s32.totalorder %v633, 0
  %vm710 = vcmp.lt.s32.totalorder %v640, 0
  %vm711 = vcmp.lt.s32.totalorder %v647, 0
  %vm712 = vcmp.lt.s32.totalorder %v654, 0
  %vm713 = vcmp.lt.s32.totalorder %v661, 0
  %vm714 = vcmp.lt.s32.totalorder %v668, 0
  %vm715 = vcmp.lt.s32.totalorder %v675, 0
  %vm716 = vcmp.lt.s32.totalorder %v682, 0
  %vm717 = vcmp.lt.s32.totalorder %v689, 0
  %vm718 = vmand %vm704, %vm690
  %vm719 = vmand %vm705, %vm691
  %vm720 = vmand %vm706, %vm692
  %vm721 = vmand %vm707, %vm693
  %vm722 = vmand %vm708, %vm694
  %vm723 = vmand %vm709, %vm695
  %vm724 = vmand %vm710, %vm696
  %vm725 = vmand %vm711, %vm697
  %vm726 = vmand %vm712, %vm698
  %vm727 = vmand %vm713, %vm699
  %vm728 = vmand %vm714, %vm700
  %vm729 = vmand %vm715, %vm701
  %vm730 = vmand %vm716, %vm702
  %vm731 = vmand %vm717, %vm703
  %v732 = vadd.s32 %v598, 8
  %v733 = vadd.s32 %v605, 8
  %v734 = vadd.s32 %v612, 8
  %v735 = vadd.s32 %v619, 8
  %v736 = vadd.s32 %v626, 8
  %v737 = vadd.s32 %v633, 8
  %v738 = vadd.s32 %v640, 8
  %v739 = vadd.s32 %v647, 8
  %v740 = vadd.s32 %v654, 8
  %v741 = vadd.s32 %v661, 8
  %v742 = vadd.s32 %v668, 8
  %v743 = vadd.s32 %v675, 8
  %v744 = vadd.s32 %v682, 8
  %v745 = vadd.s32 %v689, 8
  %v746 = vsel %vm718, %v732, %v598
  %v747 = vsel %vm719, %v733, %v605
  %v748 = vsel %vm720, %v734, %v612
  %v749 = vsel %vm721, %v735, %v619
  %v750 = vsel %vm722, %v736, %v626
  %v751 = vsel %vm723, %v737, %v633
  %v752 = vsel %vm724, %v738, %v640
  %v753 = vsel %vm725, %v739, %v647
  %v754 = vsel %vm726, %v740, %v654
  %v755 = vsel %vm727, %v741, %v661
  %v756 = vsel %vm728, %v742, %v668
  %v757 = vsel %vm729, %v743, %v675
  %v758 = vsel %vm730, %v744, %v682
  %v759 = vsel %vm731, %v745, %v689
  %v760 = vlaneseq
  %v761 = vand.u32 %v760, 127
  %vm762 = vcmp.lt.s32.totalorder %v761, 0
  %v763 = vsub.s32 0, %v761
  %v764 = vsel %vm762, %v763, %v761
  %v765 = vshrl.u32 %v764, 3
  %v766 = vand.u32 %v764, 7
  %v767 = vsub.s32 0, %v766
  %v768 = vsel %vm762, %v767, %v766
  %vm769 = vcmp.ne.s32.totalorder %v768, 0
  %vm770 = vcmp.lt.s32.totalorder %v768, 0
  %vm771 = vmand %vm770, %vm769
  %v772 = vadd.s32 %v768, 8
  %v773 = vsel %vm771, %v772, %v768
  %vm774 = vcmp.eq.s32.totalorder %v746, %v773
  %vm775 = vcmp.eq.s32.totalorder %v747, %v773
  %vm776 = vcmp.eq.s32.totalorder %v748, %v773
  %vm777 = vcmp.eq.s32.totalorder %v749, %v773
  %vm778 = vcmp.eq.s32.totalorder %v750, %v773
  %vm779 = vcmp.eq.s32.totalorder %v751, %v773
  %vm780 = vcmp.eq.s32.totalorder %v752, %v773
  %vm781 = vcmp.eq.s32.totalorder %v753, %v773
  %vm782 = vcmp.eq.s32.totalorder %v754, %v773
  %vm783 = vcmp.eq.s32.totalorder %v755, %v773
  %vm784 = vcmp.eq.s32.totalorder %v756, %v773
  %vm785 = vcmp.eq.s32.totalorder %v757, %v773
  %vm786 = vcmp.eq.s32.totalorder %v758, %v773
  %vm787 = vcmp.eq.s32.totalorder %v759, %v773
  %v788 = vsel %vm774, 1, 0
  %v789 = vsel %vm775, 1, 0
  %v790 = vsel %vm776, 1, 0
  %v791 = vsel %vm777, 1, 0
  %v792 = vsel %vm778, 1, 0
  %v793 = vsel %vm779, 1, 0
  %v794 = vsel %vm780, 1, 0
  %v795 = vsel %vm781, 1, 0
  %v796 = vsel %vm782, 1, 0
  %v797 = vsel %vm783, 1, 0
  %v798 = vsel %vm784, 1, 0
  %v799 = vsel %vm785, 1, 0
  %v800 = vsel %vm786, 1, 0
  %v801 = vsel %vm787, 1, 0
  %v802 = vcvt.s32.f32 %v788
  %v803 = vcvt.s32.f32 %v789
  %v804 = vcvt.s32.f32 %v790
  %v805 = vcvt.s32.f32 %v791
  %v806 = vcvt.s32.f32 %v792
  %v807 = vcvt.s32.f32 %v793
  %v808 = vcvt.s32.f32 %v794
  %v809 = vcvt.s32.f32 %v795
  %v810 = vcvt.s32.f32 %v796
  %v811 = vcvt.s32.f32 %v797
  %v812 = vcvt.s32.f32 %v798
  %v813 = vcvt.s32.f32 %v799
  %v814 = vcvt.s32.f32 %v800
  %v815 = vcvt.s32.f32 %v801
  %vm816 = vcmask 228352
  %v818 = vsel %vm816, 1.0, 0
  %vm820 = vcmask 1043456
  %v822 = vsel %vm820, %v576, 0
  %824 = vmatprep.subr.mxu0 0.0
  %825 = vmatpush1.msra.mxu0 %v573
  %826 = vmatprep.subr.mxu0 0.0
  %827 = vmatpush1.msra.mxu0 %v574
  %828 = vmatprep.subr.mxu0 0.0
  %829 = vmatpush1.msra.mxu0 %v575
  %830 = vmatprep.subr.mxu0 0.0
  %831 = vmatpush1.msra.mxu0 %v822
  %832 = vmatprep.subr.mxu0 0.0
  %833 = vmatpush1.msra.mxu0 0.0
  %834 = vmatprep.subr.mxu0 0.0
  %835 = vmatpush1.msra.mxu0 0.0
  %836 = vmatprep.subr.mxu0 0.0
  %837 = vmatpush1.msra.mxu0 0.0
  %838 = vmatprep.subr.mxu0 0.0
  %839 = vmatpush1.msra.mxu0 0.0
  %840 = vmatprep.subr.mxu0 0.0
  %841 = vmatpush1.msra.mxu0 0.0
  %842 = vmatprep.subr.mxu0 0.0
  %843 = vmatpush1.msra.mxu0 0.0
  %844 = vmatprep.subr.mxu0 0.0
  %845 = vmatpush1.msra.mxu0 0.0
  %846 = vmatprep.subr.mxu0 0.0
  %847 = vmatpush1.msra.mxu0 0.0
  %848 = vmatprep.subr.mxu0 0.0
  %849 = vmatpush1.msra.mxu0 0.0
  %850 = vmatprep.subr.mxu0 0.0
  %851 = vmatpush1.msra.mxu0 0.0
  %852 = vmatprep.subr.mxu0 0.0
  %853 = vmatpush1.msra.mxu0 0.0
  %854 = vmatprep.subr.mxu0 0.0
  %855 = vmatpush1.msra.mxu0 0.0
  %856 = vmatprep.subr.mxu0 0.0
  %857 = vmatpush1.msra.mxu0 0.0
  %858 = vmatprep.subr.mxu0 0.0
  %859 = vmatpush1.msra.mxu0 0.0
  %860 = vmatprep.subr.mxu0 0.0
  %861 = vmatpush1.msra.mxu0 0.0
  %862 = vmatprep.subr.mxu0 0.0
  %863 = vmatpush1.msra.mxu0 0.0
  %864 = vmatprep.subr.mxu0 0.0
  %865 = vmatpush1.msra.mxu0 0.0
  %866 = vmatprep.subr.mxu0 0.0
  %867 = vmatpush1.msra.mxu0 0.0
  %868 = vmatprep.subr.mxu0 0.0
  %869 = vmatpush1.msra.mxu0 0.0
  %870 = vmatprep.subr.mxu0 0.0
  %871 = vmatpush1.msra.mxu0 0.0
  %872 = vmatprep.subr.mxu0 0.0
  %873 = vmatpush1.msra.mxu0 0.0
  %874 = vmatprep.subr.mxu0 0.0
  %875 = vmatpush1.msra.mxu0 0.0
  %876 = vmatprep.subr.mxu0 0.0
  %877 = vmatpush1.msra.mxu0 0.0
  %878 = vmatprep.subr.mxu0 0.0
  %879 = vmatpush1.msra.mxu0 0.0
  %880 = vmatprep.subr.mxu0 0.0
  %881 = vmatpush1.msra.mxu0 0.0
  %882 = vmatprep.subr.mxu0 0.0
  %883 = vmatpush1.msra.mxu0 0.0
  %884 = vmatprep.subr.mxu0 0.0
  %885 = vmatpush1.msra.mxu0 0.0
  %886 = vmatprep.subr.mxu0 0.0
  %887 = vmatpush1.msra.mxu0 0.0
  %888 = vmatprep.mubr.f32.mxu0 0.0
  %889 = vmatmul.mubr.f32.gmra.mrb[0].mxu0 %v818
  %v890 = vpop.f32.mrb[0].mxu0
  %v891 = vadd.f32 0.0, %v890
  %v892 = vpop.f32.mrb[0].mxu0
  %893 = vdwg.mxu0
  %v895 = vsel %vm292, %v891, 0
  %897 = vmatprep.subr.mxu0 0.0
  %898 = vmatpush1.msra.mxu0 %v802
  %899 = vmatprep.subr.mxu0 0.0
  %900 = vmatpush1.msra.mxu0 %v803
  %901 = vmatprep.subr.mxu0 0.0
  %902 = vmatpush1.msra.mxu0 %v804
  %903 = vmatprep.subr.mxu0 0.0
  %904 = vmatpush1.msra.mxu0 %v805
  %905 = vmatprep.subr.mxu0 0.0
  %906 = vmatpush1.msra.mxu0 %v806
  %907 = vmatprep.subr.mxu0 0.0
  %908 = vmatpush1.msra.mxu0 %v807
  %909 = vmatprep.subr.mxu0 0.0
  %910 = vmatpush1.msra.mxu0 %v808
  %911 = vmatprep.subr.mxu0 0.0
  %912 = vmatpush1.msra.mxu0 %v809
  %913 = vmatprep.subr.mxu0 0.0
  %914 = vmatpush1.msra.mxu0 %v810
  %915 = vmatprep.subr.mxu0 0.0
  %916 = vmatpush1.msra.mxu0 %v811
  %917 = vmatprep.subr.mxu0 0.0
  %918 = vmatpush1.msra.mxu0 %v812
  %919 = vmatprep.subr.mxu0 0.0
  %920 = vmatpush1.msra.mxu0 %v813
  %921 = vmatprep.subr.mxu0 0.0
  %922 = vmatpush1.msra.mxu0 %v814
  %923 = vmatprep.subr.mxu0 0.0
  %924 = vmatpush1.msra.mxu0 %v815
  %925 = vmatprep.subr.mxu0 0.0
  %926 = vmatpush1.msra.mxu0 0.0
  %927 = vmatprep.subr.mxu0 0.0
  %928 = vmatpush1.msra.mxu0 0.0
  %929 = vmatprep.subr.mxu0 0.0
  %930 = vmatpush1.msra.mxu0 0.0
  %931 = vmatprep.subr.mxu0 0.0
  %932 = vmatpush1.msra.mxu0 0.0
  %933 = vmatprep.subr.mxu0 0.0
  %934 = vmatpush1.msra.mxu0 0.0
  %935 = vmatprep.subr.mxu0 0.0
  %936 = vmatpush1.msra.mxu0 0.0
  %937 = vmatprep.subr.mxu0 0.0
  %938 = vmatpush1.msra.mxu0 0.0
  %939 = vmatprep.subr.mxu0 0.0
  %940 = vmatpush1.msra.mxu0 0.0
  %941 = vmatprep.subr.mxu0 0.0
  %942 = vmatpush1.msra.mxu0 0.0
  %943 = vmatprep.subr.mxu0 0.0
  %944 = vmatpush1.msra.mxu0 0.0
  %945 = vmatprep.subr.mxu0 0.0
  %946 = vmatpush1.msra.mxu0 0.0
  %947 = vmatprep.subr.mxu0 0.0
  %948 = vmatpush1.msra.mxu0 0.0
  %949 = vmatprep.subr.mxu0 0.0
  %950 = vmatpush1.msra.mxu0 0.0
  %951 = vmatprep.subr.mxu0 0.0
  %952 = vmatpush1.msra.mxu0 0.0
  %953 = vmatprep.subr.mxu0 0.0
  %954 = vmatpush1.msra.mxu0 0.0
  %955 = vmatprep.subr.mxu0 0.0
  %956 = vmatpush1.msra.mxu0 0.0
  %957 = vmatprep.subr.mxu0 0.0
  %958 = vmatpush1.msra.mxu0 0.0
  %959 = vmatprep.subr.mxu0 0.0
  %960 = vmatpush1.msra.mxu0 0.0
  %961 = vmatprep.mubr.f32.mxu0 0.0
  %962 = vmatmul.mubr.f32.gmra.mrb[0].mxu0 %v895
  %v963 = vpop.f32.mrb[0].mxu0
  %v964 = vadd.f32 0.0, %v963
  %v965 = vpop.f32.mrb[0].mxu0
  %966 = vdwg.mxu0
  %v967 = vmul.f32 %v964, 0.0025510204
  %v968 = vlaneseq
  %v969 = vshrl.u32 %v968, 7
  %v970 = vsub.s32 0, %v969
  %v971 = vrot.slane %v967, %v970
  %v972 = vsub.f32 %v573, %v971
  %v973 = vsub.f32 %v574, %v971
  %v974 = vsub.f32 %v575, %v971
  %v975 = vsub.f32 %v576, %v971
  %v976 = vmul.f32 %v972, %v972
  %v977 = vmul.f32 %v973, %v973
  %v978 = vmul.f32 %v974, %v974
  %v979 = vmul.f32 %v975, %v975
  %v981 = vsel %vm820, %v979, 0
  %983 = vmatprep.subr.mxu0 0.0
  %984 = vmatpush1.msra.mxu0 %v976
  %985 = vmatprep.subr.mxu0 0.0
  %986 = vmatpush1.msra.mxu0 %v977
  %987 = vmatprep.subr.mxu0 0.0
  %988 = vmatpush1.msra.mxu0 %v978
  %989 = vmatprep.subr.mxu0 0.0
  %990 = vmatpush1.msra.mxu0 %v981
  %991 = vmatprep.subr.mxu0 0.0
  %992 = vmatpush1.msra.mxu0 0.0
  %993 = vmatprep.subr.mxu0 0.0
  %994 = vmatpush1.msra.mxu0 0.0
  %995 = vmatprep.subr.mxu0 0.0
  %996 = vmatpush1.msra.mxu0 0.0
  %997 = vmatprep.subr.mxu0 0.0
  %998 = vmatpush1.msra.mxu0 0.0
  %999 = vmatprep.subr.mxu0 0.0
  %1000 = vmatpush1.msra.mxu0 0.0
  %1001 = vmatprep.subr.mxu0 0.0
  %1002 = vmatpush1.msra.mxu0 0.0
  %1003 = vmatprep.subr.mxu0 0.0
  %1004 = vmatpush1.msra.mxu0 0.0
  %1005 = vmatprep.subr.mxu0 0.0
  %1006 = vmatpush1.msra.mxu0 0.0
  %1007 = vmatprep.subr.mxu0 0.0
  %1008 = vmatpush1.msra.mxu0 0.0
  %1009 = vmatprep.subr.mxu0 0.0
  %1010 = vmatpush1.msra.mxu0 0.0
  %1011 = vmatprep.subr.mxu0 0.0
  %1012 = vmatpush1.msra.mxu0 0.0
  %1013 = vmatprep.subr.mxu0 0.0
  %1014 = vmatpush1.msra.mxu0 0.0
  %1015 = vmatprep.subr.mxu0 0.0
  %1016 = vmatpush1.msra.mxu0 0.0
  %1017 = vmatprep.subr.mxu0 0.0
  %1018 = vmatpush1.msra.mxu0 0.0
  %1019 = vmatprep.subr.mxu0 0.0
  %1020 = vmatpush1.msra.mxu0 0.0
  %1021 = vmatprep.subr.mxu0 0.0
  %1022 = vmatpush1.msra.mxu0 0.0
  %1023 = vmatprep.subr.mxu0 0.0
  %1024 = vmatpush1.msra.mxu0 0.0
  %1025 = vmatprep.subr.mxu0 0.0
  %1026 = vmatpush1.msra.mxu0 0.0
  %1027 = vmatprep.subr.mxu0 0.0
  %1028 = vmatpush1.msra.mxu0 0.0
  %1029 = vmatprep.subr.mxu0 0.0
  %1030 = vmatpush1.msra.mxu0 0.0
  %1031 = vmatprep.subr.mxu0 0.0
  %1032 = vmatpush1.msra.mxu0 0.0
  %1033 = vmatprep.subr.mxu0 0.0
  %1034 = vmatpush1.msra.mxu0 0.0
  %1035 = vmatprep.subr.mxu0 0.0
  %1036 = vmatpush1.msra.mxu0 0.0
  %1037 = vmatprep.subr.mxu0 0.0
  %1038 = vmatpush1.msra.mxu0 0.0
  %1039 = vmatprep.subr.mxu0 0.0
  %1040 = vmatpush1.msra.mxu0 0.0
  %1041 = vmatprep.subr.mxu0 0.0
  %1042 = vmatpush1.msra.mxu0 0.0
  %1043 = vmatprep.subr.mxu0 0.0
  %1044 = vmatpush1.msra.mxu0 0.0
  %1045 = vmatprep.subr.mxu0 0.0
  %1046 = vmatpush1.msra.mxu0 0.0
  %1047 = vmatprep.mubr.f32.mxu0 0.0
  %1048 = vmatmul.mubr.f32.gmra.mrb[0].mxu0 %v818
  %v1049 = vpop.f32.mrb[0].mxu0
  %v1050 = vadd.f32 0.0, %v1049
  %v1051 = vpop.f32.mrb[0].mxu0
  %1052 = vdwg.mxu0
  %v1054 = vsel %vm292, %v1050, 0
  %1056 = vmatprep.subr.mxu0 0.0
  %1057 = vmatpush1.msra.mxu0 %v802
  %1058 = vmatprep.subr.mxu0 0.0
  %1059 = vmatpush1.msra.mxu0 %v803
  %1060 = vmatprep.subr.mxu0 0.0
  %1061 = vmatpush1.msra.mxu0 %v804
  %1062 = vmatprep.subr.mxu0 0.0
  %1063 = vmatpush1.msra.mxu0 %v805
  %1064 = vmatprep.subr.mxu0 0.0
  %1065 = vmatpush1.msra.mxu0 %v806
  %1066 = vmatprep.subr.mxu0 0.0
  %1067 = vmatpush1.msra.mxu0 %v807
  %1068 = vmatprep.subr.mxu0 0.0
  %1069 = vmatpush1.msra.mxu0 %v808
  %1070 = vmatprep.subr.mxu0 0.0
  %1071 = vmatpush1.msra.mxu0 %v809
  %1072 = vmatprep.subr.mxu0 0.0
  %1073 = vmatpush1.msra.mxu0 %v810
  %1074 = vmatprep.subr.mxu0 0.0
  %1075 = vmatpush1.msra.mxu0 %v811
  %1076 = vmatprep.subr.mxu0 0.0
  %1077 = vmatpush1.msra.mxu0 %v812
  %1078 = vmatprep.subr.mxu0 0.0
  %1079 = vmatpush1.msra.mxu0 %v813
  %1080 = vmatprep.subr.mxu0 0.0
  %1081 = vmatpush1.msra.mxu0 %v814
  %1082 = vmatprep.subr.mxu0 0.0
  %1083 = vmatpush1.msra.mxu0 %v815
  %1084 = vmatprep.subr.mxu0 0.0
  %1085 = vmatpush1.msra.mxu0 0.0
  %1086 = vmatprep.subr.mxu0 0.0
  %1087 = vmatpush1.msra.mxu0 0.0
  %1088 = vmatprep.subr.mxu0 0.0
  %1089 = vmatpush1.msra.mxu0 0.0
  %1090 = vmatprep.subr.mxu0 0.0
  %1091 = vmatpush1.msra.mxu0 0.0
  %1092 = vmatprep.subr.mxu0 0.0
  %1093 = vmatpush1.msra.mxu0 0.0
  %1094 = vmatprep.subr.mxu0 0.0
  %1095 = vmatpush1.msra.mxu0 0.0
  %1096 = vmatprep.subr.mxu0 0.0
  %1097 = vmatpush1.msra.mxu0 0.0
  %1098 = vmatprep.subr.mxu0 0.0
  %1099 = vmatpush1.msra.mxu0 0.0
  %1100 = vmatprep.subr.mxu0 0.0
  %1101 = vmatpush1.msra.mxu0 0.0
  %1102 = vmatprep.subr.mxu0 0.0
  %1103 = vmatpush1.msra.mxu0 0.0
  %1104 = vmatprep.subr.mxu0 0.0
  %1105 = vmatpush1.msra.mxu0 0.0
  %1106 = vmatprep.subr.mxu0 0.0
  %1107 = vmatpush1.msra.mxu0 0.0
  %1108 = vmatprep.subr.mxu0 0.0
  %1109 = vmatpush1.msra.mxu0 0.0
  %1110 = vmatprep.subr.mxu0 0.0
  %1111 = vmatpush1.msra.mxu0 0.0
  %1112 = vmatprep.subr.mxu0 0.0
  %1113 = vmatpush1.msra.mxu0 0.0
  %1114 = vmatprep.subr.mxu0 0.0
  %1115 = vmatpush1.msra.mxu0 0.0
  %1116 = vmatprep.subr.mxu0 0.0
  %1117 = vmatpush1.msra.mxu0 0.0
  %1118 = vmatprep.subr.mxu0 0.0
  %1119 = vmatpush1.msra.mxu0 0.0
  %1120 = vmatprep.mubr.f32.mxu0 0.0
  %1121 = vmatmul.mubr.f32.gmra.mrb[0].mxu0 %v1054
  %v1122 = vpop.f32.mrb[0].mxu0
  %v1123 = vadd.f32 0.0, %v1122
  %v1124 = vpop.f32.mrb[0].mxu0
  %1125 = vdwg.mxu0
  %v1126 = vmul.f32 %v1123, 0.0025510204
  %v1127 = vld [vmem:[%s2] sm:$0x1]
  %v1128 = vadd.f32 %v1126, 1e-05
  %v1129 = vrsqrt.pop %v1128
  %v1130 = vmul.f32 %v1127, %v1129
  %v1131 = vld [vmem:[%s2 + $0x1] sm:$0x1]
  %v1132 = vmul.f32 %v967, %v1130
  %v1133 = vsub.f32 %v1131, %v1132
  %v1134 = vlaneseq
  %v1135 = vshrl.u32 %v1134, 7
  %v1136 = vsub.s32 0, %v1135
  %v1137 = vrot.slane %v1130, %v1136
  %v1138 = vmul.f32 %v573, %v1137
  %v1139 = vmul.f32 %v574, %v1137
  %v1140 = vmul.f32 %v575, %v1137
  %v1141 = vmul.f32 %v576, %v1137
  %v1142 = vlaneseq
  %v1143 = vshrl.u32 %v1142, 7
  %v1144 = vsub.s32 0, %v1143
  %v1145 = vrot.slane %v1133, %v1144
  %v1146 = vadd.f32 %v1138, %v1145
  %v1147 = vadd.f32 %v1139, %v1145
  %v1148 = vadd.f32 %v1140, %v1145
  %v1149 = vadd.f32 %v1141, %v1145
  %v1150 = vmax.f32 %v1146, 0.0
  %v1151 = vmax.f32 %v1147, 0.0
  %v1152 = vmax.f32 %v1148, 0.0
  %v1153 = vmax.f32 %v1149, 0.0
  %1154 = vst.msk [vmem:[%s3] sm:$0xff] %vm292, %v1150
  %1155 = vst.msk [vmem:[%s3 + $0x8] sm:$0xff] %vm292, %v1151
  %1156 = vst.msk [vmem:[%s3 + $0x10] sm:$0xff] %vm292, %v1152
  %vm1157 = vcmask 912384
  %1158 = vst.msk [vmem:[%s3 + $0x18] sm:$0xf] %vm1157, %v1153
  // Predicated region
  $region14: #{block_forward.1} parent=0 // pred_check
    _
  $region15: #{block_forward.1} parent=0 // pred_check_branch
    %1160 = sbr.rel (0) target = $region17
  $region16: #{block_forward.1} parent=0 // pred_region
    _
  $region17: #{block_forward.1} parent=0 // pred_fallthru
    _
  // Predicated region
  $region18: #{block_forward.1} parent=0 // pred_check
    _
  $region19: #{block_forward.1} parent=0 // pred_check_branch
    %1162 = sbr.rel (0) target = $region21
  $region20: #{block_forward.1} parent=0 // pred_region
    _
  $region21: #{block_forward.1} parent=0 // pred_fallthru
    _

</llo_original>
